<compile_context>
chip_gen: v5e
topology: v5e:2x2
jax: 0.10.0
libtpu: 0.0.40
codegen_flags: <defaults>
</compile_context>

<pallas_src>
import math

import numpy as np
import jax
import jax.numpy as jnp
from jax import lax
from jax.experimental import pallas as pl
from jax.experimental.pallas import tpu as pltpu

LANES = 128     # vreg lane width; also the (padded) vocab / slab width
_ROW_PAD = 8    # sublane tile


# ----------------------------- small math helpers -----------------------------
def _sigmoid(x):
    return 1.0 / (1.0 + jnp.exp(-x))


def _silu(x):
    return x * _sigmoid(x)


def _softplus(x):
    # matches F.softplus default threshold=20; untaken-branch exp clamped.
    return jnp.where(x > 20.0, x, jnp.log(1.0 + jnp.exp(jnp.minimum(x, 20.0))))


# ------------------------------- weight packing --------------------------------
def _pack_slab(p, B, L):
    """Pre-fuse / pre-tile every weight and every selection constant into one
    lane-dense [rows, 128] f32 slab (single DMA)."""
    d_model = p["embedding"].shape[1]
    d_inner = p["w_in"].shape[0] // 2
    d_state = p["A_logT"].shape[0]
    d_conv = p["conv_wt"].shape[0]
    vocab = p["w_lm"].shape[0]
    LB = B * L
    NG = LANES // d_inner                      # lane groups per packed row (=4)
    PR = (B * d_state * d_inner) // LANES      # packed rows per timestep (=8)
    RP = L * PR

    assert LANES % d_inner == 0 and d_state % NG == 0
    assert B * d_state * d_inner == PR * LANES and PR % _ROW_PAD == 0
    assert vocab <= LANES

    f32 = jnp.float32
    hi = jax.lax.Precision.HIGHEST
    w_in_x_T = p["w_in"][:d_inner].T.astype(f32)                 # [d_model, d_inner]
    w_in_z_T = p["w_in"][d_inner:].T.astype(f32)
    conv_wt = p["conv_wt"].astype(f32)                           # [d_conv, d_inner]
    w_delta = jnp.dot(p["w_dt"], p["w_xdt"], precision=hi).astype(f32)   # [d_inner, d_inner]
    w_fused = jnp.dot(p["w_lm"], p["w_out"], precision=hi).astype(f32)   # [vocab,  d_inner]
    negA = -jnp.exp(p["A_logT"].astype(f32))                     # [d_state, d_inner]

    def tile4(a):                                                # [r, d_inner] -> [r, 128]
        return jnp.tile(a, (1, NG))

    # ---- projection 1: in_proj(x) + causal depthwise conv fused, lane-tiled 4x.
    # X_stack column block j holds x delayed by j timesteps; tap conv_wt[d_conv-1-j]
    # multiplies it (reproduces nn.Conv1d(padding=d_conv-1)[..., :L]).
    w0a = jnp.concatenate(
        [tile4(w_in_x_T) * tile4(conv_wt[d_conv - 1 - j:d_conv - j, :])
         for j in range(d_conv)], axis=0)                        # [d_conv*d_model, 128]
    b0a = tile4(p["conv_b"].astype(f32))                         # [1, 128]
    w0z = jnp.concatenate(
        [tile4(w_in_z_T),
         jnp.zeros(((d_conv - 1) * d_model, LANES), f32)], axis=0)

    # ---- projection 2: delta / B / C from u4 (input already lane-tiled -> /NG).
    w1d = jnp.tile(w_delta.T, (NG, NG)) / NG                     # [128, 128]
    b1d = tile4(p["b_dt"].astype(f32))
    w1bc = jnp.concatenate(
        [jnp.tile(p["w_xB"].T.astype(f32), (NG, NG)),
         jnp.tile(p["w_xC"].T.astype(f32), (NG, NG))], axis=1) / NG   # [128, 128]

    # ---- packed-scan constants.  Row rho = t*PR + p, lane = g*d_inner + c;
    # scan pair r = p*NG + g  ->  batch b = r // d_state, state s = r % d_state.
    rho = np.arange(RP)
    tb_of = (rho // PR) * B + ((rho % PR) * NG) // d_state
    s_pk = (tb_of[:, None] == np.arange(LB)[None, :]).astype(np.float32)   # [RP, LB]
    s_out = np.ascontiguousarray(s_pk.T)                                   # [LB, RP]

    j = np.arange(NG * d_state)
    m2 = (j[None, :] % d_state ==
          ((rho[:, None] % PR) * NG + j[None, :] // d_state) % d_state
          ).astype(np.float32)                                             # [RP, NG*d_state]
    g2 = ((np.arange(NG * d_state)[:, None] // d_state) ==
          (np.arange(LANES)[None, :] // d_inner)).astype(np.float32)       # [NG*d_state, 128]

    p_idx = np.arange(PR)[:, None]
    lam = np.arange(LANES)[None, :]
    s_idx = (p_idx * NG + lam // d_inner) % d_state
    c_idx = np.broadcast_to(lam % d_inner, s_idx.shape)
    negA_pk = jnp.tile(negA[s_idx, c_idx], (L, 1))                         # [RP, 128]

    d4q = tile4(p["D"].astype(f32)) / NG                                   # [1, 128]
    wfin = jnp.tile(w_fused.T, (NG, 1))                                    # [128, vocab]
    wfin = jnp.pad(wfin, ((0, 0), (0, LANES - vocab)))
    b_lm = jnp.pad(p["b_lm"].astype(f32), ((0, 0), (0, LANES - vocab)))

    entries = [
        ("W0A", w0a), ("b0A", b0a), ("W0Z", w0z),
        ("W1D", w1d), ("b1D", b1d), ("W1BC", w1bc),
        ("S_pk", jnp.asarray(s_pk)), ("S_out", jnp.asarray(s_out)),
        ("M2", jnp.asarray(m2)), ("G2", jnp.asarray(g2)),
        ("negA_pk", negA_pk), ("D4q", d4q),
        ("Wfin", wfin), ("b_lm", b_lm),
    ]
    layout, rows, off = {}, [], 0
    for name, arr in entries:
        arr = arr.astype(f32)
        if arr.shape[1] < LANES:
            arr = jnp.pad(arr, ((0, 0), (0, LANES - arr.shape[1])))
        n = arr.shape[0]
        layout[name] = (off, n)
        pad = (-n) % _ROW_PAD
        rows.append(arr)
        if pad:
            rows.append(jnp.zeros((pad, LANES), f32))
        off += n + pad
    dims = dict(LB=LB, NG=NG, PR=PR, RP=RP, d_state=d_state)
    return jnp.concatenate(rows, axis=0), layout, dims


# --------------------------------- the kernel ----------------------------------
def _make_kernel(layout, dims, L):
    LB, PR, RP = dims["LB"], dims["PR"], dims["RP"]
    NGDS = dims["NG"] * dims["d_state"]            # 64 masked-selection lanes

    def kernel(xs_ref, slab_ref, out_ref, dA_s, dBu_s, h_s):
        def w(name):
            off, n = layout[name]
            return slab_ref[off:off + n, :]

        xs = xs_ref[...]                                           # [LB, d_conv*d_model]

        # ---- in_proj + causal conv (weights pre-fused, lane-tiled 4x) and gate z.
        u4 = _silu(jnp.dot(xs, w("W0A"), preferred_element_type=jnp.float32)
                   + w("b0A"))                                     # [LB, 128] u tiled 4x
        z4 = jnp.dot(xs, w("W0Z"), preferred_element_type=jnp.float32)

        # ---- delta / B / C projections (RHS pre-tiled, /NG folded into weights).
        d4 = _softplus(jnp.dot(u4, w("W1D"), preferred_element_type=jnp.float32)
                       + w("b1D"))                                 # [LB, 128] delta tiled 4x
        bc4 = jnp.dot(u4, w("W1BC"), preferred_element_type=jnp.float32)   # [B tiled | C tiled]
        du4 = d4 * u4

        S_pk = w("S_pk")[:, :LB]                                   # [RP, LB]  0/1 constant
        M2 = w("M2")[:, :NGDS]                                     # [RP, 64]  diag mask
        G2 = w("G2")                                               # [64, 128] group bcast

        # ---- scan operands, ONE (8,128) f32 tile per timestep; single bulk exp.
        dA_s[...] = jnp.exp(
            jnp.dot(S_pk, d4, preferred_element_type=jnp.float32) * w("negA_pk"))
        B_pk = jnp.dot(
            jnp.dot(S_pk, bc4[:, :NGDS], preferred_element_type=jnp.float32) * M2,
            G2, preferred_element_type=jnp.float32)                # B[tb,s] bcast over c
        dBu_s[...] = jnp.dot(S_pk, du4, preferred_element_type=jnp.float32) * B_pk

        # ---- the only serial part: one aligned single-vreg FMA per timestep.
        def step(t, h):
            o = pl.multiple_of(t * PR, PR)
            h = dA_s[pl.ds(o, PR), :] * h + dBu_s[pl.ds(o, PR), :]
            h_s[pl.ds(o, PR), :] = h
            return h

        lax.fori_loop(0, L, step, jnp.zeros((PR, LANES), jnp.float32),
                      unroll=True)

        # ---- post-scan C contraction (off the serial path), skip, gate, and the
        # fused out_proj @ lm_head (lane-group fold folded into Wfin / D4q).
        C_pk = jnp.dot(
            jnp.dot(S_pk, bc4[:, NGDS:], preferred_element_type=jnp.float32) * M2,
            G2, preferred_element_type=jnp.float32)
        y4 = jnp.dot(w("S_out")[:, :RP], C_pk * h_s[...],
                     preferred_element_type=jnp.float32)           # [LB, 128]
        g4 = (y4 + u4 * w("D4q")) * _silu(z4)
        out_ref[...] = jnp.dot(g4, w("Wfin"),
                               preferred_element_type=jnp.float32) + w("b_lm")

    return kernel


# ---------------------------------- wrapper ------------------------------------
def mamba_lm_forward(input_ids, params):
    B, L = input_ids.shape
    d_model = params["embedding"].shape[1]
    d_conv = params["conv_wt"].shape[0]
    vocab = params["w_lm"].shape[0]
    LB = B * L

    slab, layout, dims = _pack_slab(params, B, L)

    # Embedding gather + causal-shift stacking is layout glue done in plain JAX.
    # Rows are TIME-MAJOR (r = t*B + b); column block j holds x delayed by j
    # timesteps so the depthwise conv becomes part of one fused in-kernel matmul
    # (no unaligned sublane shifts inside the kernel).
    x = jnp.take(params["embedding"], input_ids, axis=0).astype(jnp.float32)
    x_tm = jnp.transpose(x, (1, 0, 2)).reshape(LB, d_model)
    blocks = [x_tm]
    for j in range(1, d_conv):
        blocks.append(jnp.concatenate(
            [jnp.zeros((j * B, d_model), jnp.float32), x_tm[:LB - j * B]], axis=0))
    xs = jnp.concatenate(blocks, axis=1)                       # [LB, d_conv*d_model]

    kernel = _make_kernel(layout, dims, L)
    RP = dims["RP"]

    grid_spec = pltpu.PrefetchScalarGridSpec(
        num_scalar_prefetch=0,
        grid=(1,),     # whole batch in one invocation at this toy size
        in_specs=[
            pl.BlockSpec(xs.shape, lambda i: (0, 0)),
            pl.BlockSpec(slab.shape, lambda i: (0, 0)),
        ],
        out_specs=pl.BlockSpec((LB, LANES), lambda i: (0, 0)),
        scratch_shapes=[
            pltpu.VMEM((RP, LANES), jnp.float32),    # dA       (packed per-step tiles)
            pltpu.VMEM((RP, LANES), jnp.float32),    # delta*u*B
            pltpu.VMEM((RP, LANES), jnp.float32),    # h trajectory
        ],
    )
    logits_tm = pl.pallas_call(
        kernel,
        out_shape=jax.ShapeDtypeStruct((LB, LANES), jnp.float32),
        grid_spec=grid_spec,
        compiler_params=pltpu.CompilerParams(
            dimension_semantics=("arbitrary",)),
    )(xs, slab)

    logits_tm = logits_tm[:, :vocab]
    # undo the time-major flattening: [L*B, vocab] -> [B, L, vocab]
    return jnp.transpose(logits_tm.reshape(L, B, vocab), (1, 0, 2))


# ------------------------- deterministic parameter init ------------------------
def init_params(key, vocab, d_model=16, d_state=16, d_conv=4, expand=2):
    d_inner = expand * d_model
    dt_rank = math.ceil(d_model / 16)
    ks = jax.random.split(key, 12)

    def rnd(k, shape, scale):
        return (scale * jax.random.normal(k, shape)).astype(jnp.float32)

    a_logT = jnp.log(jnp.arange(1, d_state + 1, dtype=jnp.float32))[:, None]
    params = {
        "embedding": rnd(ks[0], (vocab, d_model), 0.1),
        "w_in":   rnd(ks[1], (2 * d_inner, d_model), 0.1),     # in_proj.weight
        "conv_wt": rnd(ks[2], (d_conv, d_inner), 0.2),          # conv1d.weight[:,0,:].T
        "conv_b": rnd(ks[3], (1, d_inner), 0.1),                # conv1d.bias
        "w_xdt":  rnd(ks[4], (dt_rank, d_inner), 0.1),          # x_proj rows -> dt
        "w_xB":   rnd(ks[5], (d_state, d_inner), 0.1),          # x_proj rows -> B
        "w_xC":   rnd(ks[6], (d_state, d_inner), 0.1),          # x_proj rows -> C
        "w_dt":   rnd(ks[7], (d_inner, dt_rank), 0.5),          # dt_proj.weight
        "b_dt":   rnd(ks[8], (1, d_inner), 0.5),                # dt_proj.bias
        "A_logT": jnp.asarray(jnp.broadcast_to(a_logT, (d_state, d_inner)),
                              dtype=jnp.float32),               # A_log.T (Mamba init)
        "D":      jnp.ones((1, d_inner), jnp.float32),
        "w_out":  rnd(ks[9], (d_model, d_inner), 0.1),          # out_proj.weight
        "w_lm":   rnd(ks[10], (vocab, d_model), 0.1),           # lm_head.weight
        "b_lm":   rnd(ks[11], (1, vocab), 0.1),                 # lm_head.bias
    }
    return params


# ---------------------------- pure-JAX reference --------------------------------
def _reference_single(xb, p):
    d_inner = p["w_in"].shape[0] // 2
    d_conv = p["conv_wt"].shape[0]
    L = xb.shape[0]

    xz = xb @ p["w_in"].T
    xc, z = xz[:, :d_inner], xz[:, d_inner:]
    xpad = jnp.concatenate([jnp.zeros((d_conv - 1, d_inner)), xc], axis=0)
    acc = jnp.broadcast_to(p["conv_b"], (L, d_inner))
    for k in range(d_conv):
        acc = acc + xpad[k:k + L, :] * p["conv_wt"][k:k + 1, :]
    u = _silu(acc)

    delta = _softplus((u @ p["w_xdt"].T) @ p["w_dt"].T + p["b_dt"])
    Bm = u @ p["w_xB"].T
    Cm = u @ p["w_xC"].T
    A = -jnp.exp(p["A_logT"].T)                     # [d_inner, d_state]

    h = jnp.zeros((d_inner, p["A_logT"].shape[0]))
    ys = []
    for t in range(L):
        h = (jnp.exp(delta[t][:, None] * A) * h
             + delta[t][:, None] * Bm[t][None, :] * u[t][:, None])
        ys.append((h * Cm[t][None, :]).sum(axis=1))
    y = jnp.stack(ys, axis=0) + u * p["D"]
    y = y * _silu(z)
    o = y @ p["w_out"].T
    return o @ p["w_lm"].T + p["b_lm"]


def reference_forward(input_ids, params):
    x = jnp.take(params["embedding"], input_ids, axis=0).astype(jnp.float32)
    return jnp.stack([_reference_single(x[b], params)
                      for b in range(x.shape[0])], axis=0)


# ------------------------------------ main --------------------------------------
if __name__ == "__main__":
    VOCAB = 128
    B, L = 2, 8
    D_MODEL, D_STATE, D_CONV, EXPAND = 16, 16, 4, 2

    key = jax.random.PRNGKey(0)
    k_ids, k_params = jax.random.split(key)
    params = init_params(k_params, VOCAB, D_MODEL, D_STATE, D_CONV, EXPAND)
    input_ids = jax.random.randint(k_ids, (B, L), 0, VOCAB, dtype=jnp.int32)

    logits = mamba_lm_forward(input_ids, params)
    logits = jax.block_until_ready(logits)

    assert logits.shape == (B, L, VOCAB), logits.shape
    assert bool(jnp.all(jnp.isfinite(logits)))

    ref = jax.block_until_ready(reference_forward(input_ids, params))
    assert bool(jnp.allclose(logits, ref, rtol=1e-3, atol=1e-3)), (
        float(jnp.max(jnp.abs(logits - ref))))

    print("KERNEL_OK")
</pallas_src>

<mosaic_0001>
module attributes {stable_mosaic.version = 11 : i64} {
  func.func @kernel(%arg0: i32, %arg1: memref<16x64xf32, #tpu.memory_space<vmem>>, %arg2: memref<816x128xf32, #tpu.memory_space<vmem>>, %arg3: memref<16x128xf32, #tpu.memory_space<vmem>>, %arg4: memref<64x128xf32, #tpu.memory_space<vmem>>, %arg5: memref<64x128xf32, #tpu.memory_space<vmem>>, %arg6: memref<64x128xf32, #tpu.memory_space<vmem>>) attributes {dimension_semantics = [#tpu.dimension_semantics<arbitrary>], iteration_bounds = array<i64: 1>, scalar_prefetch = 0 : i64, scratch_operands = 3 : i64, tpu.core_type = #tpu.core_type<tc>, window_params = [{pipeline_mode = #tpu.pipeline_mode<synchronous>, transform_indices = @transform_0, window_bounds = array<i64: 16, 64>}, {pipeline_mode = #tpu.pipeline_mode<synchronous>, transform_indices = @transform_1, window_bounds = array<i64: 816, 128>}, {pipeline_mode = #tpu.pipeline_mode<synchronous>, transform_indices = @transform_2, window_bounds = array<i64: 16, 128>}]} {
    %c0 = arith.constant 0 : index
    %c0_0 = arith.constant 0 : index
    %0 = vector.load %arg1[%c0, %c0_0] : memref<16x64xf32, #tpu.memory_space<vmem>>, vector<16x64xf32>
    %c0_1 = arith.constant 0 : index
    %c0_2 = arith.constant 0 : index
    %1 = vector.load %arg2[%c0_1, %c0_2] : memref<816x128xf32, #tpu.memory_space<vmem>>, vector<64x128xf32>
    %cst = arith.constant dense<0.000000e+00> : vector<16x128xf32>
    %2 = tpu.matmul %0, %1, %cst {dimension_numbers = #tpu.dot_dimension_numbers<[1], [0], [0], [1], [0, 0, 1, 1], [], []>} : vector<16x64xf32>, vector<64x128xf32>, vector<16x128xf32> -> vector<16x128xf32>
    %c64 = arith.constant 64 : index
    %c0_3 = arith.constant 0 : index
    %3 = vector.load %arg2[%c64, %c0_3] : memref<816x128xf32, #tpu.memory_space<vmem>>, vector<1x128xf32>
    %4 = vector.broadcast %3 : vector<1x128xf32> to vector<16x128xf32>
    %5 = arith.addf %2, %4 : vector<16x128xf32>
    %cst_4 = arith.constant 0.000000e+00 : f32
    %6 = vector.broadcast %cst_4 : f32 to vector<16x128xf32>
    %7 = arith.subf %6, %5 : vector<16x128xf32>
    %8 = math.exp %7 : vector<16x128xf32>
    %cst_5 = arith.constant 1.000000e+00 : f32
    %9 = vector.broadcast %cst_5 : f32 to vector<16x128xf32>
    %10 = arith.addf %9, %8 : vector<16x128xf32>
    %cst_6 = arith.constant 1.000000e+00 : f32
    %11 = vector.broadcast %cst_6 : f32 to vector<16x128xf32>
    %12 = arith.divf %11, %10 : vector<16x128xf32>
    %13 = arith.mulf %5, %12 : vector<16x128xf32>
    %c72 = arith.constant 72 : index
    %c0_7 = arith.constant 0 : index
    %14 = vector.load %arg2[%c72, %c0_7] : memref<816x128xf32, #tpu.memory_space<vmem>>, vector<64x128xf32>
    %cst_8 = arith.constant dense<0.000000e+00> : vector<16x128xf32>
    %15 = tpu.matmul %0, %14, %cst_8 {dimension_numbers = #tpu.dot_dimension_numbers<[1], [0], [0], [1], [0, 0, 1, 1], [], []>} : vector<16x64xf32>, vector<64x128xf32>, vector<16x128xf32> -> vector<16x128xf32>
    %c136 = arith.constant 136 : index
    %c0_9 = arith.constant 0 : index
    %16 = vector.load %arg2[%c136, %c0_9] : memref<816x128xf32, #tpu.memory_space<vmem>>, vector<128x128xf32>
    %cst_10 = arith.constant dense<0.000000e+00> : vector<16x128xf32>
    %17 = tpu.matmul %13, %16, %cst_10 {dimension_numbers = #tpu.dot_dimension_numbers<[1], [0], [0], [1], [0, 0, 1, 1], [], []>} : vector<16x128xf32>, vector<128x128xf32>, vector<16x128xf32> -> vector<16x128xf32>
    %c264 = arith.constant 264 : index
    %c0_11 = arith.constant 0 : index
    %18 = vector.load %arg2[%c264, %c0_11] : memref<816x128xf32, #tpu.memory_space<vmem>>, vector<1x128xf32>
    %19 = vector.broadcast %18 : vector<1x128xf32> to vector<16x128xf32>
    %20 = arith.addf %17, %19 : vector<16x128xf32>
    %cst_12 = arith.constant 2.000000e+01 : f32
    %21 = vector.broadcast %cst_12 : f32 to vector<16x128xf32>
    %22 = arith.cmpf ogt, %20, %21 : vector<16x128xf32>
    %cst_13 = arith.constant 2.000000e+01 : f32
    %23 = vector.broadcast %cst_13 : f32 to vector<16x128xf32>
    %24 = arith.minimumf %20, %23 : vector<16x128xf32>
    %25 = math.exp %24 : vector<16x128xf32>
    %cst_14 = arith.constant 1.000000e+00 : f32
    %26 = vector.broadcast %cst_14 : f32 to vector<16x128xf32>
    %27 = arith.addf %26, %25 : vector<16x128xf32>
    %28 = math.log %27 : vector<16x128xf32>
    %29 = arith.select %22, %20, %28 : vector<16x128xi1>, vector<16x128xf32>
    %c272 = arith.constant 272 : index
    %c0_15 = arith.constant 0 : index
    %30 = vector.load %arg2[%c272, %c0_15] : memref<816x128xf32, #tpu.memory_space<vmem>>, vector<128x128xf32>
    %cst_16 = arith.constant dense<0.000000e+00> : vector<16x128xf32>
    %31 = tpu.matmul %13, %30, %cst_16 {dimension_numbers = #tpu.dot_dimension_numbers<[1], [0], [0], [1], [0, 0, 1, 1], [], []>} : vector<16x128xf32>, vector<128x128xf32>, vector<16x128xf32> -> vector<16x128xf32>
    %32 = arith.mulf %29, %13 : vector<16x128xf32>
    %c400 = arith.constant 400 : index
    %c0_17 = arith.constant 0 : index
    %33 = vector.load %arg2[%c400, %c0_17] : memref<816x128xf32, #tpu.memory_space<vmem>>, vector<64x128xf32>
    %34 = vector.extract_strided_slice %33 {offsets = [0, 0], sizes = [64, 16], strides = [1, 1]} : vector<64x128xf32> to vector<64x16xf32>
    %c480 = arith.constant 480 : index
    %c0_18 = arith.constant 0 : index
    %35 = vector.load %arg2[%c480, %c0_18] : memref<816x128xf32, #tpu.memory_space<vmem>>, vector<64x128xf32>
    %36 = vector.extract_strided_slice %35 {offsets = [0, 0], sizes = [64, 64], strides = [1, 1]} : vector<64x128xf32> to vector<64x64xf32>
    %c544 = arith.constant 544 : index
    %c0_19 = arith.constant 0 : index
    %37 = vector.load %arg2[%c544, %c0_19] : memref<816x128xf32, #tpu.memory_space<vmem>>, vector<64x128xf32>
    %cst_20 = arith.constant dense<0.000000e+00> : vector<64x128xf32>
    %38 = tpu.matmul %34, %29, %cst_20 {dimension_numbers = #tpu.dot_dimension_numbers<[1], [0], [0], [1], [0, 0, 1, 1], [], []>} : vector<64x16xf32>, vector<16x128xf32>, vector<64x128xf32> -> vector<64x128xf32>
    %c608 = arith.constant 608 : index
    %c0_21 = arith.constant 0 : index
    %39 = vector.load %arg2[%c608, %c0_21] : memref<816x128xf32, #tpu.memory_space<vmem>>, vector<64x128xf32>
    %40 = arith.mulf %38, %39 : vector<64x128xf32>
    %41 = math.exp %40 : vector<64x128xf32>
    %c0_22 = arith.constant 0 : index
    %c0_23 = arith.constant 0 : index
    %42 = vector.load %arg4[%c0_22, %c0_23] : memref<64x128xf32, #tpu.memory_space<vmem>>, vector<64x128xf32>
    tpu.vector_store %arg4[%c0_22, %c0_23], %41 {strides = array<i32>} : memref<64x128xf32, #tpu.memory_space<vmem>>, vector<64x128xf32>,
    %43 = vector.extract_strided_slice %31 {offsets = [0, 0], sizes = [16, 64], strides = [1, 1]} : vector<16x128xf32> to vector<16x64xf32>
    %cst_24 = arith.constant dense<0.000000e+00> : vector<64x64xf32>
    %44 = tpu.matmul %34, %43, %cst_24 {dimension_numbers = #tpu.dot_dimension_numbers<[1], [0], [0], [1], [0, 0, 1, 1], [], []>} : vector<64x16xf32>, vector<16x64xf32>, vector<64x64xf32> -> vector<64x64xf32>
    %45 = arith.mulf %44, %36 : vector<64x64xf32>
    %cst_25 = arith.constant dense<0.000000e+00> : vector<64x128xf32>
    %46 = tpu.matmul %45, %37, %cst_25 {dimension_numbers = #tpu.dot_dimension_numbers<[1], [0], [0], [1], [0, 0, 1, 1], [], []>} : vector<64x64xf32>, vector<64x128xf32>, vector<64x128xf32> -> vector<64x128xf32>
    %cst_26 = arith.constant dense<0.000000e+00> : vector<64x128xf32>
    %47 = tpu.matmul %34, %32, %cst_26 {dimension_numbers = #tpu.dot_dimension_numbers<[1], [0], [0], [1], [0, 0, 1, 1], [], []>} : vector<64x16xf32>, vector<16x128xf32>, vector<64x128xf32> -> vector<64x128xf32>
    %48 = arith.mulf %47, %46 : vector<64x128xf32>
    %c0_27 = arith.constant 0 : index
    %c0_28 = arith.constant 0 : index
    %49 = vector.load %arg5[%c0_27, %c0_28] : memref<64x128xf32, #tpu.memory_space<vmem>>, vector<64x128xf32>
    tpu.vector_store %arg5[%c0_27, %c0_28], %48 {strides = array<i32>} : memref<64x128xf32, #tpu.memory_space<vmem>>, vector<64x128xf32>,
    %cst_29 = arith.constant 0.000000e+00 : f32
    %50 = vector.broadcast %cst_29 : f32 to vector<8x128xf32>
    %c0_i32 = arith.constant 0 : i32
    %c8_i32 = arith.constant 8 : i32
    %51 = arith.muli %c0_i32, %c8_i32 : i32
    %52 = tpu.assume_multiple %51, 8 : i32
    %53 = arith.index_cast %52 : i32 to index
    %c0_30 = arith.constant 0 : index
    %54 = vector.load %arg4[%53, %c0_30] : memref<64x128xf32, #tpu.memory_space<vmem>>, vector<8x128xf32>
    %55 = arith.mulf %54, %50 : vector<8x128xf32>
    %56 = arith.index_cast %52 : i32 to index
    %c0_31 = arith.constant 0 : index
    %57 = vector.load %arg5[%56, %c0_31] : memref<64x128xf32, #tpu.memory_space<vmem>>, vector<8x128xf32>
    %58 = arith.addf %55, %57 : vector<8x128xf32>
    %59 = arith.index_cast %52 : i32 to index
    %c0_32 = arith.constant 0 : index
    %60 = vector.load %arg6[%59, %c0_32] : memref<64x128xf32, #tpu.memory_space<vmem>>, vector<8x128xf32>
    tpu.vector_store %arg6[%59, %c0_32], %58 {strides = array<i32>} : memref<64x128xf32, #tpu.memory_space<vmem>>, vector<8x128xf32>,
    %c1_i32 = arith.constant 1 : i32
    %c8_i32_33 = arith.constant 8 : i32
    %61 = arith.muli %c1_i32, %c8_i32_33 : i32
    %62 = tpu.assume_multiple %61, 8 : i32
    %63 = arith.index_cast %62 : i32 to index
    %c0_34 = arith.constant 0 : index
    %64 = vector.load %arg4[%63, %c0_34] : memref<64x128xf32, #tpu.memory_space<vmem>>, vector<8x128xf32>
    %65 = arith.mulf %64, %58 : vector<8x128xf32>
    %66 = arith.index_cast %62 : i32 to index
    %c0_35 = arith.constant 0 : index
    %67 = vector.load %arg5[%66, %c0_35] : memref<64x128xf32, #tpu.memory_space<vmem>>, vector<8x128xf32>
    %68 = arith.addf %65, %67 : vector<8x128xf32>
    %69 = arith.index_cast %62 : i32 to index
    %c0_36 = arith.constant 0 : index
    %70 = vector.load %arg6[%69, %c0_36] : memref<64x128xf32, #tpu.memory_space<vmem>>, vector<8x128xf32>
    tpu.vector_store %arg6[%69, %c0_36], %68 {strides = array<i32>} : memref<64x128xf32, #tpu.memory_space<vmem>>, vector<8x128xf32>,
    %c2_i32 = arith.constant 2 : i32
    %c8_i32_37 = arith.constant 8 : i32
    %71 = arith.muli %c2_i32, %c8_i32_37 : i32
    %72 = tpu.assume_multiple %71, 8 : i32
    %73 = arith.index_cast %72 : i32 to index
    %c0_38 = arith.constant 0 : index
    %74 = vector.load %arg4[%73, %c0_38] : memref<64x128xf32, #tpu.memory_space<vmem>>, vector<8x128xf32>
    %75 = arith.mulf %74, %68 : vector<8x128xf32>
    %76 = arith.index_cast %72 : i32 to index
    %c0_39 = arith.constant 0 : index
    %77 = vector.load %arg5[%76, %c0_39] : memref<64x128xf32, #tpu.memory_space<vmem>>, vector<8x128xf32>
    %78 = arith.addf %75, %77 : vector<8x128xf32>
    %79 = arith.index_cast %72 : i32 to index
    %c0_40 = arith.constant 0 : index
    %80 = vector.load %arg6[%79, %c0_40] : memref<64x128xf32, #tpu.memory_space<vmem>>, vector<8x128xf32>
    tpu.vector_store %arg6[%79, %c0_40], %78 {strides = array<i32>} : memref<64x128xf32, #tpu.memory_space<vmem>>, vector<8x128xf32>,
    %c3_i32 = arith.constant 3 : i32
    %c8_i32_41 = arith.constant 8 : i32
    %81 = arith.muli %c3_i32, %c8_i32_41 : i32
    %82 = tpu.assume_multiple %81, 8 : i32
    %83 = arith.index_cast %82 : i32 to index
    %c0_42 = arith.constant 0 : index
    %84 = vector.load %arg4[%83, %c0_42] : memref<64x128xf32, #tpu.memory_space<vmem>>, vector<8x128xf32>
    %85 = arith.mulf %84, %78 : vector<8x128xf32>
    %86 = arith.index_cast %82 : i32 to index
    %c0_43 = arith.constant 0 : index
    %87 = vector.load %arg5[%86, %c0_43] : memref<64x128xf32, #tpu.memory_space<vmem>>, vector<8x128xf32>
    %88 = arith.addf %85, %87 : vector<8x128xf32>
    %89 = arith.index_cast %82 : i32 to index
    %c0_44 = arith.constant 0 : index
    %90 = vector.load %arg6[%89, %c0_44] : memref<64x128xf32, #tpu.memory_space<vmem>>, vector<8x128xf32>
    tpu.vector_store %arg6[%89, %c0_44], %88 {strides = array<i32>} : memref<64x128xf32, #tpu.memory_space<vmem>>, vector<8x128xf32>,
    %c4_i32 = arith.constant 4 : i32
    %c8_i32_45 = arith.constant 8 : i32
    %91 = arith.muli %c4_i32, %c8_i32_45 : i32
    %92 = tpu.assume_multiple %91, 8 : i32
    %93 = arith.index_cast %92 : i32 to index
    %c0_46 = arith.constant 0 : index
    %94 = vector.load %arg4[%93, %c0_46] : memref<64x128xf32, #tpu.memory_space<vmem>>, vector<8x128xf32>
    %95 = arith.mulf %94, %88 : vector<8x128xf32>
    %96 = arith.index_cast %92 : i32 to index
    %c0_47 = arith.constant 0 : index
    %97 = vector.load %arg5[%96, %c0_47] : memref<64x128xf32, #tpu.memory_space<vmem>>, vector<8x128xf32>
    %98 = arith.addf %95, %97 : vector<8x128xf32>
    %99 = arith.index_cast %92 : i32 to index
    %c0_48 = arith.constant 0 : index
    %100 = vector.load %arg6[%99, %c0_48] : memref<64x128xf32, #tpu.memory_space<vmem>>, vector<8x128xf32>
    tpu.vector_store %arg6[%99, %c0_48], %98 {strides = array<i32>} : memref<64x128xf32, #tpu.memory_space<vmem>>, vector<8x128xf32>,
    %c5_i32 = arith.constant 5 : i32
    %c8_i32_49 = arith.constant 8 : i32
    %101 = arith.muli %c5_i32, %c8_i32_49 : i32
    %102 = tpu.assume_multiple %101, 8 : i32
    %103 = arith.index_cast %102 : i32 to index
    %c0_50 = arith.constant 0 : index
    %104 = vector.load %arg4[%103, %c0_50] : memref<64x128xf32, #tpu.memory_space<vmem>>, vector<8x128xf32>
    %105 = arith.mulf %104, %98 : vector<8x128xf32>
    %106 = arith.index_cast %102 : i32 to index
    %c0_51 = arith.constant 0 : index
    %107 = vector.load %arg5[%106, %c0_51] : memref<64x128xf32, #tpu.memory_space<vmem>>, vector<8x128xf32>
    %108 = arith.addf %105, %107 : vector<8x128xf32>
    %109 = arith.index_cast %102 : i32 to index
    %c0_52 = arith.constant 0 : index
    %110 = vector.load %arg6[%109, %c0_52] : memref<64x128xf32, #tpu.memory_space<vmem>>, vector<8x128xf32>
    tpu.vector_store %arg6[%109, %c0_52], %108 {strides = array<i32>} : memref<64x128xf32, #tpu.memory_space<vmem>>, vector<8x128xf32>,
    %c6_i32 = arith.constant 6 : i32
    %c8_i32_53 = arith.constant 8 : i32
    %111 = arith.muli %c6_i32, %c8_i32_53 : i32
    %112 = tpu.assume_multiple %111, 8 : i32
    %113 = arith.index_cast %112 : i32 to index
    %c0_54 = arith.constant 0 : index
    %114 = vector.load %arg4[%113, %c0_54] : memref<64x128xf32, #tpu.memory_space<vmem>>, vector<8x128xf32>
    %115 = arith.mulf %114, %108 : vector<8x128xf32>
    %116 = arith.index_cast %112 : i32 to index
    %c0_55 = arith.constant 0 : index
    %117 = vector.load %arg5[%116, %c0_55] : memref<64x128xf32, #tpu.memory_space<vmem>>, vector<8x128xf32>
    %118 = arith.addf %115, %117 : vector<8x128xf32>
    %119 = arith.index_cast %112 : i32 to index
    %c0_56 = arith.constant 0 : index
    %120 = vector.load %arg6[%119, %c0_56] : memref<64x128xf32, #tpu.memory_space<vmem>>, vector<8x128xf32>
    tpu.vector_store %arg6[%119, %c0_56], %118 {strides = array<i32>} : memref<64x128xf32, #tpu.memory_space<vmem>>, vector<8x128xf32>,
    %c7_i32 = arith.constant 7 : i32
    %c8_i32_57 = arith.constant 8 : i32
    %121 = arith.muli %c7_i32, %c8_i32_57 : i32
    %122 = tpu.assume_multiple %121, 8 : i32
    %123 = arith.index_cast %122 : i32 to index
    %c0_58 = arith.constant 0 : index
    %124 = vector.load %arg4[%123, %c0_58] : memref<64x128xf32, #tpu.memory_space<vmem>>, vector<8x128xf32>
    %125 = arith.mulf %124, %118 : vector<8x128xf32>
    %126 = arith.index_cast %122 : i32 to index
    %c0_59 = arith.constant 0 : index
    %127 = vector.load %arg5[%126, %c0_59] : memref<64x128xf32, #tpu.memory_space<vmem>>, vector<8x128xf32>
    %128 = arith.addf %125, %127 : vector<8x128xf32>
    %129 = arith.index_cast %122 : i32 to index
    %c0_60 = arith.constant 0 : index
    %130 = vector.load %arg6[%129, %c0_60] : memref<64x128xf32, #tpu.memory_space<vmem>>, vector<8x128xf32>
    tpu.vector_store %arg6[%129, %c0_60], %128 {strides = array<i32>} : memref<64x128xf32, #tpu.memory_space<vmem>>, vector<8x128xf32>,
    %c8_i32_61 = arith.constant 8 : i32
    %131 = vector.extract_strided_slice %31 {offsets = [0, 64], sizes = [16, 64], strides = [1, 1]} : vector<16x128xf32> to vector<16x64xf32>
    %cst_62 = arith.constant dense<0.000000e+00> : vector<64x64xf32>
    %132 = tpu.matmul %34, %131, %cst_62 {dimension_numbers = #tpu.dot_dimension_numbers<[1], [0], [0], [1], [0, 0, 1, 1], [], []>} : vector<64x16xf32>, vector<16x64xf32>, vector<64x64xf32> -> vector<64x64xf32>
    %133 = arith.mulf %132, %36 : vector<64x64xf32>
    %cst_63 = arith.constant dense<0.000000e+00> : vector<64x128xf32>
    %134 = tpu.matmul %133, %37, %cst_63 {dimension_numbers = #tpu.dot_dimension_numbers<[1], [0], [0], [1], [0, 0, 1, 1], [], []>} : vector<64x64xf32>, vector<64x128xf32>, vector<64x128xf32> -> vector<64x128xf32>
    %c464 = arith.constant 464 : index
    %c0_64 = arith.constant 0 : index
    %135 = vector.load %arg2[%c464, %c0_64] : memref<816x128xf32, #tpu.memory_space<vmem>>, vector<16x128xf32>
    %136 = vector.extract_strided_slice %135 {offsets = [0, 0], sizes = [16, 64], strides = [1, 1]} : vector<16x128xf32> to vector<16x64xf32>
    %c0_65 = arith.constant 0 : index
    %c0_66 = arith.constant 0 : index
    %137 = vector.load %arg6[%c0_65, %c0_66] : memref<64x128xf32, #tpu.memory_space<vmem>>, vector<64x128xf32>
    %138 = arith.mulf %134, %137 : vector<64x128xf32>
    %cst_67 = arith.constant dense<0.000000e+00> : vector<16x128xf32>
    %139 = tpu.matmul %136, %138, %cst_67 {dimension_numbers = #tpu.dot_dimension_numbers<[1], [0], [0], [1], [0, 0, 1, 1], [], []>} : vector<16x64xf32>, vector<64x128xf32>, vector<16x128xf32> -> vector<16x128xf32>
    %c672 = arith.constant 672 : index
    %c0_68 = arith.constant 0 : index
    %140 = vector.load %arg2[%c672, %c0_68] : memref<816x128xf32, #tpu.memory_space<vmem>>, vector<1x128xf32>
    %141 = vector.broadcast %140 : vector<1x128xf32> to vector<16x128xf32>
    %142 = arith.mulf %13, %141 : vector<16x128xf32>
    %143 = arith.addf %139, %142 : vector<16x128xf32>
    %cst_69 = arith.constant 0.000000e+00 : f32
    %144 = vector.broadcast %cst_69 : f32 to vector<16x128xf32>
    %145 = arith.subf %144, %15 : vector<16x128xf32>
    %146 = math.exp %145 : vector<16x128xf32>
    %cst_70 = arith.constant 1.000000e+00 : f32
    %147 = vector.broadcast %cst_70 : f32 to vector<16x128xf32>
    %148 = arith.addf %147, %146 : vector<16x128xf32>
    %cst_71 = arith.constant 1.000000e+00 : f32
    %149 = vector.broadcast %cst_71 : f32 to vector<16x128xf32>
    %150 = arith.divf %149, %148 : vector<16x128xf32>
    %151 = arith.mulf %15, %150 : vector<16x128xf32>
    %152 = arith.mulf %143, %151 : vector<16x128xf32>
    %c680 = arith.constant 680 : index
    %c0_72 = arith.constant 0 : index
    %153 = vector.load %arg2[%c680, %c0_72] : memref<816x128xf32, #tpu.memory_space<vmem>>, vector<128x128xf32>
    %cst_73 = arith.constant dense<0.000000e+00> : vector<16x128xf32>
    %154 = tpu.matmul %152, %153, %cst_73 {dimension_numbers = #tpu.dot_dimension_numbers<[1], [0], [0], [1], [0, 0, 1, 1], [], []>} : vector<16x128xf32>, vector<128x128xf32>, vector<16x128xf32> -> vector<16x128xf32>
    %c808 = arith.constant 808 : index
    %c0_74 = arith.constant 0 : index
    %155 = vector.load %arg2[%c808, %c0_74] : memref<816x128xf32, #tpu.memory_space<vmem>>, vector<1x128xf32>
    %156 = vector.broadcast %155 : vector<1x128xf32> to vector<16x128xf32>
    %157 = arith.addf %154, %156 : vector<16x128xf32>
    %c0_75 = arith.constant 0 : index
    %c0_76 = arith.constant 0 : index
    %158 = vector.load %arg3[%c0_75, %c0_76] : memref<16x128xf32, #tpu.memory_space<vmem>>, vector<16x128xf32>
    tpu.vector_store %arg3[%c0_75, %c0_76], %157 {strides = array<i32>} : memref<16x128xf32, #tpu.memory_space<vmem>>, vector<16x128xf32>,
    return
  }
  func.func @transform_0(%arg0: i32) -> (i32, i32) {
    %c0_i32 = arith.constant 0 : i32
    %c0_i32_0 = arith.constant 0 : i32
    %c0_i32_1 = arith.constant 0 : i32
    return %c0_i32, %c0_i32_0 : i32, i32
  }
  func.func @transform_1(%arg0: i32) -> (i32, i32) {
    %c0_i32 = arith.constant 0 : i32
    %c0_i32_0 = arith.constant 0 : i32
    %c0_i32_1 = arith.constant 0 : i32
    return %c0_i32, %c0_i32_0 : i32, i32
  }
  func.func @transform_2(%arg0: i32) -> (i32, i32) {
    %c0_i32 = arith.constant 0 : i32
    %c0_i32_0 = arith.constant 0 : i32
    %c0_i32_1 = arith.constant 0 : i32
    return %c0_i32, %c0_i32_0 : i32, i32
  }
}

</mosaic_0001>

<llo_original>
// kernel: tpu_custom_call.1
$region0: #{tpu_custom_call.1}
  #allocation0 [shape = 'u32[]', space=smem, size = 0x4, offset = 0x4, fixed_abs, tag = 'smem constant byte address 0x4 - core index']
  #allocation1 [shape = 'u32[72,128]{1,0:T(1,128)}', space=vmem, size = 0x9000, scoped, tag = 'internal scratch']
  #allocation2 [shape = 'f32[64,128]{1,0:T(8,128)}', space=vmem, size = 0x8000, scoped, tag = 'scratch operand']
  #allocation3 [shape = 'f32[64,128]{1,0:T(8,128)}', space=vmem, size = 0x8000, scoped, tag = 'scratch operand']
  #allocation4 [shape = 'f32[64,128]{1,0:T(8,128)}', space=vmem, size = 0x8000, scoped, tag = 'scratch operand']
  %s0 = inlined_call_operand.hbm [shape: f32[16,64], index: 0, kind: input, shape index: {}]
  %s1 = inlined_call_operand.hbm [shape: f32[816,128], index: 1, kind: input, shape index: {}]
  %s2 = inlined_call_operand.hbm [shape: f32[16,128], index: 2, kind: output, shape index: {}]
  %s3 = sld [smem:[#allocation0]]
  $region26: #{tpu_custom_call.1} parent=0
    _
  %s5 = ssub.s32 1, %s3
  %s6 = scalar_select 0, %s5, %s3
  $region1: #{tpu_custom_call.1} parent=0
    #allocation5 [shape = 'u8[8192]{0}', space=vmem, size = 0x2000, scoped, tag = 'input window, operand 0, single buffered']
    #allocation6 [shape = 's32[1]{0}', space=sflag, size = 0x4, scoped, tag = 'scoped memory for tpu_custom_call.1']
    #allocation7 [shape = 's32[1]{0}', space=sflag, size = 0x4, scoped, tag = 'scoped memory for tpu_custom_call.1']
    #allocation8 [shape = 'u8[417792]{0}', space=vmem, size = 0x66000, scoped, tag = 'input window, operand 1, single buffered']
    #allocation9 [shape = 's32[1]{0}', space=sflag, size = 0x4, scoped, tag = 'scoped memory for tpu_custom_call.1']
    #allocation10 [shape = 'u8[8192]{0}', space=vmem, size = 0x2000, scoped, tag = 'output window, operand 0, single buffered']
    %7 = vsyncpa [#allocation6], 0
    %8 = vsyncpa [#allocation9], 0
    %9 = vsyncpa [#allocation7], 0
    // Predicated region
    $region2: #{tpu_custom_call.1} parent=1 // pred_check
      _
    $region3: #{tpu_custom_call.1} parent=1 // pred_check_branch
      %11 = sbr.rel (0) target = $region5
    $region4: #{tpu_custom_call.1} parent=1 // pred_region
      %13 = vsyncadd [#allocation6], 0
      %s14 = sshll.u32 %s0, 4
      %s15 = int_to_ptr.hbm [resolvable:$true] %s14
      %s16 = sshll.u32 [#allocation5], 4
      %s17 = int_to_ptr.vmem [resolvable:$true] %s16
      %22 = dma.hbm_to_vmem [thread:$0]  %s15, 256, %s17, [#allocation6], 128, 128, 8
    $region5: #{tpu_custom_call.1} parent=1 // pred_fallthru
      _
    // Predicated region
    $region6: #{tpu_custom_call.1} parent=1 // pred_check
      _
    $region7: #{tpu_custom_call.1} parent=1 // pred_check_branch
      %24 = sbr.rel (0) target = $region9
    $region8: #{tpu_custom_call.1} parent=1 // pred_region
      %26 = vsyncadd [#allocation9], 0
      %s27 = sshll.u32 %s1, 4
      %s28 = int_to_ptr.hbm [resolvable:$true] %s27
      %s29 = sshll.u32 [#allocation8], 4
      %s30 = int_to_ptr.vmem [resolvable:$true] %s29
      %35 = dma.hbm_to_vmem [thread:$0]  %s28, 13056, %s30, [#allocation9], 128, 128, 8
    $region9: #{tpu_custom_call.1} parent=1 // pred_fallthru
      _
    // Predicated region
    $region10: #{tpu_custom_call.1} parent=1 // pred_check
      _
    $region11: #{tpu_custom_call.1} parent=1 // pred_check_branch
      %37 = sbr.rel (0) target = $region13
    $region12: #{tpu_custom_call.1} parent=1 // pred_region
      %39 = dma.done [#allocation6], 256
    $region13: #{tpu_custom_call.1} parent=1 // pred_fallthru
      _
    // Predicated region
    $region14: #{tpu_custom_call.1} parent=1 // pred_check
      _
    $region15: #{tpu_custom_call.1} parent=1 // pred_check_branch
      %41 = sbr.rel (0) target = $region17
    $region16: #{tpu_custom_call.1} parent=1 // pred_region
      %43 = dma.done [#allocation9], 13056
    $region17: #{tpu_custom_call.1} parent=1 // pred_fallthru
      _
    %v44 = vld [vmem:[#allocation5] sm:$0xff]
    %v45 = vld [vmem:[#allocation5 + $0x8] sm:$0xff]
    %v46 = vld [vmem:[#allocation8] sm:$0xff]
    %v47 = vld [vmem:[#allocation8 + $0x8] sm:$0xff]
    %v48 = vld [vmem:[#allocation8 + $0x10] sm:$0xff]
    %v49 = vld [vmem:[#allocation8 + $0x18] sm:$0xff]
    %v50 = vld [vmem:[#allocation8 + $0x20] sm:$0xff]
    %v51 = vld [vmem:[#allocation8 + $0x28] sm:$0xff]
    %v52 = vld [vmem:[#allocation8 + $0x30] sm:$0xff]
    %v53 = vld [vmem:[#allocation8 + $0x38] sm:$0xff]
    %v54 = vld [vmem:[#allocation8 + $0x40] sm:$0x1]
    %v55 = vperm.slane %v54, 0
    %vm56 = vcmask 523264
    %v58 = vsel %vm56, %v44, 0
    %v61 = vsel %vm56, %v45, 0
    %63 = vmatpush.msra.mxu0 0.0
    %64 = vmatpush.msra.mxu0 0.0
    %65 = vmatpush.msra.mxu0 0.0
    %66 = vmatpush.msra.mxu0 0.0
    %67 = vmatpush.msra.mxu0 0.0
    %68 = vmatpush.msra.mxu0 0.0
    %69 = vmatpush.msra.mxu0 0.0
    %70 = vmatpush.msra.mxu0 0.0
    %71 = vmatpush.msra.mxu0 %v53
    %72 = vmatpush.msra.mxu0 %v52
    %73 = vmatpush.msra.mxu0 %v51
    %74 = vmatpush.msra.mxu0 %v50
    %75 = vmatpush.msra.mxu0 %v49
    %76 = vmatpush.msra.mxu0 %v48
    %77 = vmatpush.msra.mxu0 %v47
    %78 = vmatpush.msra.mxu0 %v46
    %79 = vmatmul.f32.gmra.mxu0 %v58
    %v80 = vpop.f32.mrf.mxu0
    %v81 = vadd.f32 %v55, %v80
    %82 = vmatmul.f32.gmra.mxu0 %v61
    %v83 = vpop.f32.mrf.mxu0
    %v84 = vadd.f32 %v55, %v83
    %85 = vdwg.mxu0
    %v86 = vsub.f32 0.0, %v81
    %v87 = vsub.f32 0.0, %v84
    %v88 = vmul.f32 %v86, 1.442695
    %v89 = vpow.pop %v88
    %v90 = vmul.f32 %v87, 1.442695
    %v91 = vpow.pop %v90
    %v92 = vadd.f32 %v89, 1.0
    %v93 = vadd.f32 %v91, 1.0
    %v94 = vrcp.pop %v92
    %v95 = vmul.f32 %v92, %v94
    %v96 = vsub.f32 1.0, %v95
    %v97 = vmul.f32 %v94, %v96
    %v98 = vadd.f32 %v94, %v97
    %vm99 = vweird.f32 %v92
    %vm100 = vweird.f32 %v94
    %vm101 = vmor %vm99, %vm100
    %v102 = vsel %vm101, %v94, %v98
    %v103 = vand.u32 2147483647, %v92
    %vm104 = vcmp.eq.f32.partialorder %v103, 8.507059e+37
    %v105 = vand.u32 %v92, 2147483648
    %v106 = vor.u32 1.1754944e-38, %v105
    %v107 = vsel %vm104, %v106, %v102
    %v108 = vmul.f32 1.0, %v107
    %v109 = vrcp.pop %v93
    %v110 = vmul.f32 %v93, %v109
    %v111 = vsub.f32 1.0, %v110
    %v112 = vmul.f32 %v109, %v111
    %v113 = vadd.f32 %v109, %v112
    %vm114 = vweird.f32 %v93
    %vm115 = vweird.f32 %v109
    %vm116 = vmor %vm114, %vm115
    %v117 = vsel %vm116, %v109, %v113
    %v118 = vand.u32 2147483647, %v93
    %vm119 = vcmp.eq.f32.partialorder %v118, 8.507059e+37
    %v120 = vand.u32 %v93, 2147483648
    %v121 = vor.u32 1.1754944e-38, %v120
    %v122 = vsel %vm119, %v121, %v117
    %v123 = vmul.f32 1.0, %v122
    %v124 = vmul.f32 %v81, %v108
    %v125 = vmul.f32 %v84, %v123
    %v126 = vld [vmem:[#allocation8 + $0x48] sm:$0xff]
    %v127 = vld [vmem:[#allocation8 + $0x50] sm:$0xff]
    %v128 = vld [vmem:[#allocation8 + $0x58] sm:$0xff]
    %v129 = vld [vmem:[#allocation8 + $0x60] sm:$0xff]
    %v130 = vld [vmem:[#allocation8 + $0x68] sm:$0xff]
    %v131 = vld [vmem:[#allocation8 + $0x70] sm:$0xff]
    %v132 = vld [vmem:[#allocation8 + $0x78] sm:$0xff]
    %v133 = vld [vmem:[#allocation8 + $0x80] sm:$0xff]
    %134 = vmatpush.msra.mxu0 0.0
    %135 = vmatpush.msra.mxu0 0.0
    %136 = vmatpush.msra.mxu0 0.0
    %137 = vmatpush.msra.mxu0 0.0
    %138 = vmatpush.msra.mxu0 0.0
    %139 = vmatpush.msra.mxu0 0.0
    %140 = vmatpush.msra.mxu0 0.0
    %141 = vmatpush.msra.mxu0 0.0
    %142 = vmatpush.msra.mxu0 %v133
    %143 = vmatpush.msra.mxu0 %v132
    %144 = vmatpush.msra.mxu0 %v131
    %145 = vmatpush.msra.mxu0 %v130
    %146 = vmatpush.msra.mxu0 %v129
    %147 = vmatpush.msra.mxu0 %v128
    %148 = vmatpush.msra.mxu0 %v127
    %149 = vmatpush.msra.mxu0 %v126
    %150 = vmatmul.f32.gmra.mxu0 %v58
    %v151 = vpop.f32.mrf.mxu0
    %v152 = vadd.f32 0.0, %v151
    %153 = vmatmul.f32.gmra.mxu0 %v61
    %v154 = vpop.f32.mrf.mxu0
    %v155 = vadd.f32 0.0, %v154
    %156 = vdwg.mxu0
    %v157 = vld [vmem:[#allocation8 + $0x88] sm:$0xff]
    %v158 = vld [vmem:[#allocation8 + $0x90] sm:$0xff]
    %v159 = vld [vmem:[#allocation8 + $0x98] sm:$0xff]
    %v160 = vld [vmem:[#allocation8 + $0xa0] sm:$0xff]
    %v161 = vld [vmem:[#allocation8 + $0xa8] sm:$0xff]
    %v162 = vld [vmem:[#allocation8 + $0xb0] sm:$0xff]
    %v163 = vld [vmem:[#allocation8 + $0xb8] sm:$0xff]
    %v164 = vld [vmem:[#allocation8 + $0xc0] sm:$0xff]
    %v165 = vld [vmem:[#allocation8 + $0xc8] sm:$0xff]
    %v166 = vld [vmem:[#allocation8 + $0xd0] sm:$0xff]
    %v167 = vld [vmem:[#allocation8 + $0xd8] sm:$0xff]
    %v168 = vld [vmem:[#allocation8 + $0xe0] sm:$0xff]
    %v169 = vld [vmem:[#allocation8 + $0xe8] sm:$0xff]
    %v170 = vld [vmem:[#allocation8 + $0xf0] sm:$0xff]
    %v171 = vld [vmem:[#allocation8 + $0xf8] sm:$0xff]
    %v172 = vld [vmem:[#allocation8 + $0x100] sm:$0xff]
    %v173 = vld [vmem:[#allocation8 + $0x108] sm:$0x1]
    %v174 = vperm.slane %v173, 0
    %175 = vmatpush.msra.mxu0 %v172
    %176 = vmatpush.msra.mxu0 %v171
    %177 = vmatpush.msra.mxu0 %v170
    %178 = vmatpush.msra.mxu0 %v169
    %179 = vmatpush.msra.mxu0 %v168
    %180 = vmatpush.msra.mxu0 %v167
    %181 = vmatpush.msra.mxu0 %v166
    %182 = vmatpush.msra.mxu0 %v165
    %183 = vmatpush.msra.mxu0 %v164
    %184 = vmatpush.msra.mxu0 %v163
    %185 = vmatpush.msra.mxu0 %v162
    %186 = vmatpush.msra.mxu0 %v161
    %187 = vmatpush.msra.mxu0 %v160
    %188 = vmatpush.msra.mxu0 %v159
    %189 = vmatpush.msra.mxu0 %v158
    %190 = vmatpush.msra.mxu0 %v157
    %191 = vmatmul.f32.gmra.mxu0 %v124
    %v192 = vpop.f32.mrf.mxu0
    %v193 = vadd.f32 %v174, %v192
    %194 = vmatmul.f32.gmra.mxu0 %v125
    %v195 = vpop.f32.mrf.mxu0
    %v196 = vadd.f32 %v174, %v195
    %197 = vdwg.mxu0
    %vm198 = vcmp.gt.f32.partialorder %v193, 20.0
    %vm199 = vcmp.gt.f32.partialorder %v196, 20.0
    %v200 = vmin.f32 %v193, 20.0
    %v201 = vmin.f32 %v196, 20.0
    %v202 = vmul.f32 %v200, 1.442695
    %v203 = vpow.pop %v202
    %v204 = vmul.f32 %v201, 1.442695
    %v205 = vpow.pop %v204
    %v206 = vadd.f32 %v203, 1.0
    %v207 = vadd.f32 %v205, 1.0
    %v208 = vlog2.pop %v206
    %v209 = vmul.f32 %v208, 0.6931472
    %v210 = vlog2.pop %v207
    %v211 = vmul.f32 %v210, 0.6931472
    %v212 = vsel %vm198, %v193, %v209
    %v213 = vsel %vm199, %v196, %v211
    %v214 = vld [vmem:[#allocation8 + $0x110] sm:$0xff]
    %v215 = vld [vmem:[#allocation8 + $0x118] sm:$0xff]
    %v216 = vld [vmem:[#allocation8 + $0x120] sm:$0xff]
    %v217 = vld [vmem:[#allocation8 + $0x128] sm:$0xff]
    %v218 = vld [vmem:[#allocation8 + $0x130] sm:$0xff]
    %v219 = vld [vmem:[#allocation8 + $0x138] sm:$0xff]
    %v220 = vld [vmem:[#allocation8 + $0x140] sm:$0xff]
    %v221 = vld [vmem:[#allocation8 + $0x148] sm:$0xff]
    %v222 = vld [vmem:[#allocation8 + $0x150] sm:$0xff]
    %v223 = vld [vmem:[#allocation8 + $0x158] sm:$0xff]
    %v224 = vld [vmem:[#allocation8 + $0x160] sm:$0xff]
    %v225 = vld [vmem:[#allocation8 + $0x168] sm:$0xff]
    %v226 = vld [vmem:[#allocation8 + $0x170] sm:$0xff]
    %v227 = vld [vmem:[#allocation8 + $0x178] sm:$0xff]
    %v228 = vld [vmem:[#allocation8 + $0x180] sm:$0xff]
    %v229 = vld [vmem:[#allocation8 + $0x188] sm:$0xff]
    %230 = vmatpush.msra.mxu0 %v229
    %231 = vmatpush.msra.mxu0 %v228
    %232 = vmatpush.msra.mxu0 %v227
    %233 = vmatpush.msra.mxu0 %v226
    %234 = vmatpush.msra.mxu0 %v225
    %235 = vmatpush.msra.mxu0 %v224
    %236 = vmatpush.msra.mxu0 %v223
    %237 = vmatpush.msra.mxu0 %v222
    %238 = vmatpush.msra.mxu0 %v221
    %239 = vmatpush.msra.mxu0 %v220
    %240 = vmatpush.msra.mxu0 %v219
    %241 = vmatpush.msra.mxu0 %v218
    %242 = vmatpush.msra.mxu0 %v217
    %243 = vmatpush.msra.mxu0 %v216
    %244 = vmatpush.msra.mxu0 %v215
    %245 = vmatpush.msra.mxu0 %v214
    %246 = vmatmul.f32.gmra.mxu0 %v124
    %v247 = vpop.f32.mrf.mxu0
    %v248 = vadd.f32 0.0, %v247
    %249 = vmatmul.f32.gmra.mxu0 %v125
    %v250 = vpop.f32.mrf.mxu0
    %v251 = vadd.f32 0.0, %v250
    %252 = vdwg.mxu0
    %v253 = vmul.f32 %v212, %v124
    %v254 = vmul.f32 %v213, %v125
    %v255 = vld [vmem:[#allocation8 + $0x190] sm:$0xff]
    %v256 = vld [vmem:[#allocation8 + $0x198] sm:$0xff]
    %v257 = vld [vmem:[#allocation8 + $0x1a0] sm:$0xff]
    %v258 = vld [vmem:[#allocation8 + $0x1a8] sm:$0xff]
    %v259 = vld [vmem:[#allocation8 + $0x1b0] sm:$0xff]
    %v260 = vld [vmem:[#allocation8 + $0x1b8] sm:$0xff]
    %v261 = vld [vmem:[#allocation8 + $0x1c0] sm:$0xff]
    %v262 = vld [vmem:[#allocation8 + $0x1c8] sm:$0xff]
    %v263 = vld [vmem:[#allocation8 + $0x1e0] sm:$0xff]
    %v264 = vld [vmem:[#allocation8 + $0x1e8] sm:$0xff]
    %v265 = vld [vmem:[#allocation8 + $0x1f0] sm:$0xff]
    %v266 = vld [vmem:[#allocation8 + $0x1f8] sm:$0xff]
    %v267 = vld [vmem:[#allocation8 + $0x200] sm:$0xff]
    %v268 = vld [vmem:[#allocation8 + $0x208] sm:$0xff]
    %v269 = vld [vmem:[#allocation8 + $0x210] sm:$0xff]
    %v270 = vld [vmem:[#allocation8 + $0x218] sm:$0xff]
    %v271 = vld [vmem:[#allocation8 + $0x220] sm:$0xff]
    %v272 = vld [vmem:[#allocation8 + $0x228] sm:$0xff]
    %v273 = vld [vmem:[#allocation8 + $0x230] sm:$0xff]
    %v274 = vld [vmem:[#allocation8 + $0x238] sm:$0xff]
    %v275 = vld [vmem:[#allocation8 + $0x240] sm:$0xff]
    %v276 = vld [vmem:[#allocation8 + $0x248] sm:$0xff]
    %v277 = vld [vmem:[#allocation8 + $0x250] sm:$0xff]
    %v278 = vld [vmem:[#allocation8 + $0x258] sm:$0xff]
    %vm279 = vcmask 130048
    %v281 = vsel %vm279, %v255, 0
    %v284 = vsel %vm279, %v256, 0
    %v287 = vsel %vm279, %v257, 0
    %v290 = vsel %vm279, %v258, 0
    %v293 = vsel %vm279, %v259, 0
    %v296 = vsel %vm279, %v260, 0
    %v299 = vsel %vm279, %v261, 0
    %v302 = vsel %vm279, %v262, 0
    %304 = vmatpush.msra.mxu0 0.0
    %305 = vmatpush.msra.mxu0 0.0
    %306 = vmatpush.msra.mxu0 0.0
    %307 = vmatpush.msra.mxu0 0.0
    %308 = vmatpush.msra.mxu0 0.0
    %309 = vmatpush.msra.mxu0 0.0
    %310 = vmatpush.msra.mxu0 0.0
    %311 = vmatpush.msra.mxu0 0.0
    %312 = vmatpush.msra.mxu0 0.0
    %313 = vmatpush.msra.mxu0 0.0
    %314 = vmatpush.msra.mxu0 0.0
    %315 = vmatpush.msra.mxu0 0.0
    %316 = vmatpush.msra.mxu0 0.0
    %317 = vmatpush.msra.mxu0 0.0
    %318 = vmatpush.msra.mxu0 %v213
    %319 = vmatpush.msra.mxu0 %v212
    %320 = vmatmul.f32.gmra.mxu0 %v281
    %v321 = vpop.f32.mrf.mxu0
    %v322 = vadd.f32 0.0, %v321
    %323 = vmatmul.f32.gmra.mxu0 %v284
    %v324 = vpop.f32.mrf.mxu0
    %v325 = vadd.f32 0.0, %v324
    %326 = vmatmul.f32.gmra.mxu0 %v287
    %v327 = vpop.f32.mrf.mxu0
    %v328 = vadd.f32 0.0, %v327
    %329 = vmatmul.f32.gmra.mxu0 %v290
    %v330 = vpop.f32.mrf.mxu0
    %v331 = vadd.f32 0.0, %v330
    %332 = vmatmul.f32.gmra.mxu0 %v293
    %v333 = vpop.f32.mrf.mxu0
    %v334 = vadd.f32 0.0, %v333
    %335 = vmatmul.f32.gmra.mxu0 %v296
    %v336 = vpop.f32.mrf.mxu0
    %v337 = vadd.f32 0.0, %v336
    %338 = vmatmul.f32.gmra.mxu0 %v299
    %v339 = vpop.f32.mrf.mxu0
    %v340 = vadd.f32 0.0, %v339
    %341 = vmatmul.f32.gmra.mxu0 %v302
    %v342 = vpop.f32.mrf.mxu0
    %v343 = vadd.f32 0.0, %v342
    %344 = vdwg.mxu0
    %v345 = vld [vmem:[#allocation8 + $0x260] sm:$0xff]
    %v346 = vld [vmem:[#allocation8 + $0x268] sm:$0xff]
    %v347 = vld [vmem:[#allocation8 + $0x270] sm:$0xff]
    %v348 = vld [vmem:[#allocation8 + $0x278] sm:$0xff]
    %v349 = vld [vmem:[#allocation8 + $0x280] sm:$0xff]
    %v350 = vld [vmem:[#allocation8 + $0x288] sm:$0xff]
    %v351 = vld [vmem:[#allocation8 + $0x290] sm:$0xff]
    %v352 = vld [vmem:[#allocation8 + $0x298] sm:$0xff]
    %v353 = vmul.f32 %v322, %v345
    %v354 = vmul.f32 %v325, %v346
    %v355 = vmul.f32 %v328, %v347
    %v356 = vmul.f32 %v331, %v348
    %v357 = vmul.f32 %v334, %v349
    %v358 = vmul.f32 %v337, %v350
    %v359 = vmul.f32 %v340, %v351
    %v360 = vmul.f32 %v343, %v352
    %v361 = vmul.f32 %v353, 1.442695
    %v362 = vpow.pop %v361
    %v363 = vmul.f32 %v354, 1.442695
    %v364 = vpow.pop %v363
    %v365 = vmul.f32 %v355, 1.442695
    %v366 = vpow.pop %v365
    %v367 = vmul.f32 %v356, 1.442695
    %v368 = vpow.pop %v367
    %v369 = vmul.f32 %v357, 1.442695
    %v370 = vpow.pop %v369
    %v371 = vmul.f32 %v358, 1.442695
    %v372 = vpow.pop %v371
    %v373 = vmul.f32 %v359, 1.442695
    %v374 = vpow.pop %v373
    %v375 = vmul.f32 %v360, 1.442695
    %v376 = vpow.pop %v375
    %377 = vst [vmem:[#allocation2] sm:$0xff] %v362
    %378 = vst [vmem:[#allocation2 + $0x8] sm:$0xff] %v364
    %379 = vst [vmem:[#allocation2 + $0x10] sm:$0xff] %v366
    %380 = vst [vmem:[#allocation2 + $0x18] sm:$0xff] %v368
    %381 = vst [vmem:[#allocation2 + $0x20] sm:$0xff] %v370
    %382 = vst [vmem:[#allocation2 + $0x28] sm:$0xff] %v372
    %383 = vst [vmem:[#allocation2 + $0x30] sm:$0xff] %v374
    %384 = vst [vmem:[#allocation2 + $0x38] sm:$0xff] %v376
    %385 = vmatpush.msra.mxu0 0.0
    %386 = vmatpush.msra.mxu0 0.0
    %387 = vmatpush.msra.mxu0 0.0
    %388 = vmatpush.msra.mxu0 0.0
    %389 = vmatpush.msra.mxu0 0.0
    %390 = vmatpush.msra.mxu0 0.0
    %391 = vmatpush.msra.mxu0 0.0
    %392 = vmatpush.msra.mxu0 0.0
    %393 = vmatpush.msra.mxu0 0.0
    %394 = vmatpush.msra.mxu0 0.0
    %395 = vmatpush.msra.mxu0 0.0
    %396 = vmatpush.msra.mxu0 0.0
    %397 = vmatpush.msra.mxu0 0.0
    %398 = vmatpush.msra.mxu0 0.0
    %399 = vmatpush.msra.mxu0 %v251
    %400 = vmatpush.msra.mxu0 %v248
    %401 = vmatmul.f32.gmra.mxu0 %v281
    %v402 = vpop.f32.mrf.mxu0
    %v403 = vadd.f32 0.0, %v402
    %404 = vmatmul.f32.gmra.mxu0 %v284
    %v405 = vpop.f32.mrf.mxu0
    %v406 = vadd.f32 0.0, %v405
    %407 = vmatmul.f32.gmra.mxu0 %v287
    %v408 = vpop.f32.mrf.mxu0
    %v409 = vadd.f32 0.0, %v408
    %410 = vmatmul.f32.gmra.mxu0 %v290
    %v411 = vpop.f32.mrf.mxu0
    %v412 = vadd.f32 0.0, %v411
    %413 = vmatmul.f32.gmra.mxu0 %v293
    %v414 = vpop.f32.mrf.mxu0
    %v415 = vadd.f32 0.0, %v414
    %416 = vmatmul.f32.gmra.mxu0 %v296
    %v417 = vpop.f32.mrf.mxu0
    %v418 = vadd.f32 0.0, %v417
    %419 = vmatmul.f32.gmra.mxu0 %v299
    %v420 = vpop.f32.mrf.mxu0
    %v421 = vadd.f32 0.0, %v420
    %422 = vmatmul.f32.gmra.mxu0 %v302
    %v423 = vpop.f32.mrf.mxu0
    %v424 = vadd.f32 0.0, %v423
    %425 = vdwg.mxu0
    %v426 = vmul.f32 %v403, %v263
    %v427 = vmul.f32 %v406, %v264
    %v428 = vmul.f32 %v409, %v265
    %v429 = vmul.f32 %v412, %v266
    %v430 = vmul.f32 %v415, %v267
    %v431 = vmul.f32 %v418, %v268
    %v432 = vmul.f32 %v421, %v269
    %v433 = vmul.f32 %v424, %v270
    %v435 = vsel %vm56, %v426, 0
    %v438 = vsel %vm56, %v427, 0
    %v441 = vsel %vm56, %v428, 0
    %v444 = vsel %vm56, %v429, 0
    %v447 = vsel %vm56, %v430, 0
    %v450 = vsel %vm56, %v431, 0
    %v453 = vsel %vm56, %v432, 0
    %v456 = vsel %vm56, %v433, 0
    %458 = vmatpush.msra.mxu0 0.0
    %459 = vmatpush.msra.mxu0 0.0
    %460 = vmatpush.msra.mxu0 0.0
    %461 = vmatpush.msra.mxu0 0.0
    %462 = vmatpush.msra.mxu0 0.0
    %463 = vmatpush.msra.mxu0 0.0
    %464 = vmatpush.msra.mxu0 0.0
    %465 = vmatpush.msra.mxu0 0.0
    %466 = vmatpush.msra.mxu0 %v278
    %467 = vmatpush.msra.mxu0 %v277
    %468 = vmatpush.msra.mxu0 %v276
    %469 = vmatpush.msra.mxu0 %v275
    %470 = vmatpush.msra.mxu0 %v274
    %471 = vmatpush.msra.mxu0 %v273
    %472 = vmatpush.msra.mxu0 %v272
    %473 = vmatpush.msra.mxu0 %v271
    %474 = vmatmul.f32.gmra.mxu0 %v435
    %v475 = vpop.f32.mrf.mxu0
    %v476 = vadd.f32 0.0, %v475
    %477 = vmatmul.f32.gmra.mxu0 %v438
    %v478 = vpop.f32.mrf.mxu0
    %v479 = vadd.f32 0.0, %v478
    %480 = vmatmul.f32.gmra.mxu0 %v441
    %v481 = vpop.f32.mrf.mxu0
    %v482 = vadd.f32 0.0, %v481
    %483 = vmatmul.f32.gmra.mxu0 %v444
    %v484 = vpop.f32.mrf.mxu0
    %v485 = vadd.f32 0.0, %v484
    %486 = vmatmul.f32.gmra.mxu0 %v447
    %v487 = vpop.f32.mrf.mxu0
    %v488 = vadd.f32 0.0, %v487
    %489 = vmatmul.f32.gmra.mxu0 %v450
    %v490 = vpop.f32.mrf.mxu0
    %v491 = vadd.f32 0.0, %v490
    %492 = vmatmul.f32.gmra.mxu0 %v453
    %v493 = vpop.f32.mrf.mxu0
    %v494 = vadd.f32 0.0, %v493
    %495 = vmatmul.f32.gmra.mxu0 %v456
    %v496 = vpop.f32.mrf.mxu0
    %v497 = vadd.f32 0.0, %v496
    %498 = vdwg.mxu0
    %499 = vmatpush.msra.mxu0 0.0
    %500 = vmatpush.msra.mxu0 0.0
    %501 = vmatpush.msra.mxu0 0.0
    %502 = vmatpush.msra.mxu0 0.0
    %503 = vmatpush.msra.mxu0 0.0
    %504 = vmatpush.msra.mxu0 0.0
    %505 = vmatpush.msra.mxu0 0.0
    %506 = vmatpush.msra.mxu0 0.0
    %507 = vmatpush.msra.mxu0 0.0
    %508 = vmatpush.msra.mxu0 0.0
    %509 = vmatpush.msra.mxu0 0.0
    %510 = vmatpush.msra.mxu0 0.0
    %511 = vmatpush.msra.mxu0 0.0
    %512 = vmatpush.msra.mxu0 0.0
    %513 = vmatpush.msra.mxu0 %v254
    %514 = vmatpush.msra.mxu0 %v253
    %515 = vmatmul.f32.gmra.mxu0 %v281
    %v516 = vpop.f32.mrf.mxu0
    %v517 = vadd.f32 0.0, %v516
    %518 = vmatmul.f32.gmra.mxu0 %v284
    %v519 = vpop.f32.mrf.mxu0
    %v520 = vadd.f32 0.0, %v519
    %521 = vmatmul.f32.gmra.mxu0 %v287
    %v522 = vpop.f32.mrf.mxu0
    %v523 = vadd.f32 0.0, %v522
    %524 = vmatmul.f32.gmra.mxu0 %v290
    %v525 = vpop.f32.mrf.mxu0
    %v526 = vadd.f32 0.0, %v525
    %527 = vmatmul.f32.gmra.mxu0 %v293
    %v528 = vpop.f32.mrf.mxu0
    %v529 = vadd.f32 0.0, %v528
    %530 = vmatmul.f32.gmra.mxu0 %v296
    %v531 = vpop.f32.mrf.mxu0
    %v532 = vadd.f32 0.0, %v531
    %533 = vmatmul.f32.gmra.mxu0 %v299
    %v534 = vpop.f32.mrf.mxu0
    %v535 = vadd.f32 0.0, %v534
    %536 = vmatmul.f32.gmra.mxu0 %v302
    %v537 = vpop.f32.mrf.mxu0
    %v538 = vadd.f32 0.0, %v537
    %539 = vdwg.mxu0
    %v540 = vmul.f32 %v517, %v476
    %v541 = vmul.f32 %v520, %v479
    %v542 = vmul.f32 %v523, %v482
    %v543 = vmul.f32 %v526, %v485
    %v544 = vmul.f32 %v529, %v488
    %v545 = vmul.f32 %v532, %v491
    %v546 = vmul.f32 %v535, %v494
    %v547 = vmul.f32 %v538, %v497
    %548 = vst [vmem:[#allocation3] sm:$0xff] %v540
    %549 = vst [vmem:[#allocation3 + $0x8] sm:$0xff] %v541
    %550 = vst [vmem:[#allocation3 + $0x10] sm:$0xff] %v542
    %551 = vst [vmem:[#allocation3 + $0x18] sm:$0xff] %v543
    %552 = vst [vmem:[#allocation3 + $0x20] sm:$0xff] %v544
    %553 = vst [vmem:[#allocation3 + $0x28] sm:$0xff] %v545
    %554 = vst [vmem:[#allocation3 + $0x30] sm:$0xff] %v546
    %555 = vst [vmem:[#allocation3 + $0x38] sm:$0xff] %v547
    %v556 = vld [vmem:[#allocation2] sm:$0xff]
    %v557 = vmul.f32 %v556, 0.0
    %v558 = vld [vmem:[#allocation3] sm:$0xff]
    %v559 = vadd.f32 %v557, %v558
    %560 = vst [vmem:[#allocation4] sm:$0xff] %v559
    %s561 = scalar_lea.vmem [#allocation2], 8
    %v562 = vld [vmem:[%s561] sm:$0xff]
    %v563 = vmul.f32 %v562, %v559
    %s564 = scalar_lea.vmem [#allocation3], 8
    %v565 = vld [vmem:[%s564] sm:$0xff]
    %v566 = vadd.f32 %v563, %v565
    %s567 = scalar_lea.vmem [#allocation4], 8
    %568 = vst [vmem:[%s567] sm:$0xff] %v566
    %s569 = scalar_lea.vmem [#allocation2], 16
    %v570 = vld [vmem:[%s569] sm:$0xff]
    %v571 = vmul.f32 %v570, %v566
    %s572 = scalar_lea.vmem [#allocation3], 16
    %v573 = vld [vmem:[%s572] sm:$0xff]
    %v574 = vadd.f32 %v571, %v573
    %s575 = scalar_lea.vmem [#allocation4], 16
    %576 = vst [vmem:[%s575] sm:$0xff] %v574
    %s577 = scalar_lea.vmem [#allocation2], 24
    %v578 = vld [vmem:[%s577] sm:$0xff]
    %v579 = vmul.f32 %v578, %v574
    %s580 = scalar_lea.vmem [#allocation3], 24
    %v581 = vld [vmem:[%s580] sm:$0xff]
    %v582 = vadd.f32 %v579, %v581
    %s583 = scalar_lea.vmem [#allocation4], 24
    %584 = vst [vmem:[%s583] sm:$0xff] %v582
    %s585 = scalar_lea.vmem [#allocation2], 32
    %v586 = vld [vmem:[%s585] sm:$0xff]
    %v587 = vmul.f32 %v586, %v582
    %s588 = scalar_lea.vmem [#allocation3], 32
    %v589 = vld [vmem:[%s588] sm:$0xff]
    %v590 = vadd.f32 %v587, %v589
    %s591 = scalar_lea.vmem [#allocation4], 32
    %592 = vst [vmem:[%s591] sm:$0xff] %v590
    %s593 = scalar_lea.vmem [#allocation2], 40
    %v594 = vld [vmem:[%s593] sm:$0xff]
    %v595 = vmul.f32 %v594, %v590
    %s596 = scalar_lea.vmem [#allocation3], 40
    %v597 = vld [vmem:[%s596] sm:$0xff]
    %v598 = vadd.f32 %v595, %v597
    %s599 = scalar_lea.vmem [#allocation4], 40
    %600 = vst [vmem:[%s599] sm:$0xff] %v598
    %s601 = scalar_lea.vmem [#allocation2], 48
    %v602 = vld [vmem:[%s601] sm:$0xff]
    %v603 = vmul.f32 %v602, %v598
    %s604 = scalar_lea.vmem [#allocation3], 48
    %v605 = vld [vmem:[%s604] sm:$0xff]
    %v606 = vadd.f32 %v603, %v605
    %s607 = scalar_lea.vmem [#allocation4], 48
    %608 = vst [vmem:[%s607] sm:$0xff] %v606
    %s609 = scalar_lea.vmem [#allocation2], 56
    %v610 = vld [vmem:[%s609] sm:$0xff]
    %v611 = vmul.f32 %v610, %v606
    %s612 = scalar_lea.vmem [#allocation3], 56
    %v613 = vld [vmem:[%s612] sm:$0xff]
    %v614 = vadd.f32 %v611, %v613
    %s615 = scalar_lea.vmem [#allocation4], 56
    %616 = vst [vmem:[%s615] sm:$0xff] %v614
    %619 = vrot.lane.b32.xlu0 %v248, 64
    %v620 = vpop.permute.xlu0 %619
    %621 = vrot.lane.b32.xlu0 %v251, 64
    %v622 = vpop.permute.xlu0 %621
    %625 = vmatpush.msra.mxu0 0.0
    %626 = vmatpush.msra.mxu0 0.0
    %627 = vmatpush.msra.mxu0 0.0
    %628 = vmatpush.msra.mxu0 0.0
    %629 = vmatpush.msra.mxu0 0.0
    %630 = vmatpush.msra.mxu0 0.0
    %631 = vmatpush.msra.mxu0 0.0
    %632 = vmatpush.msra.mxu0 0.0
    %633 = vmatpush.msra.mxu0 0.0
    %634 = vmatpush.msra.mxu0 0.0
    %635 = vmatpush.msra.mxu0 0.0
    %636 = vmatpush.msra.mxu0 0.0
    %637 = vmatpush.msra.mxu0 0.0
    %638 = vmatpush.msra.mxu0 0.0
    %639 = vmatpush.msra.mxu0 %v622
    %640 = vmatpush.msra.mxu0 %v620
    %641 = vmatmul.f32.gmra.mxu0 %v281
    %v642 = vpop.f32.mrf.mxu0
    %v643 = vadd.f32 0.0, %v642
    %644 = vmatmul.f32.gmra.mxu0 %v284
    %v645 = vpop.f32.mrf.mxu0
    %v646 = vadd.f32 0.0, %v645
    %647 = vmatmul.f32.gmra.mxu0 %v287
    %v648 = vpop.f32.mrf.mxu0
    %v649 = vadd.f32 0.0, %v648
    %650 = vmatmul.f32.gmra.mxu0 %v290
    %v651 = vpop.f32.mrf.mxu0
    %v652 = vadd.f32 0.0, %v651
    %653 = vmatmul.f32.gmra.mxu0 %v293
    %v654 = vpop.f32.mrf.mxu0
    %v655 = vadd.f32 0.0, %v654
    %656 = vmatmul.f32.gmra.mxu0 %v296
    %v657 = vpop.f32.mrf.mxu0
    %v658 = vadd.f32 0.0, %v657
    %659 = vmatmul.f32.gmra.mxu0 %v299
    %v660 = vpop.f32.mrf.mxu0
    %v661 = vadd.f32 0.0, %v660
    %662 = vmatmul.f32.gmra.mxu0 %v302
    %v663 = vpop.f32.mrf.mxu0
    %v664 = vadd.f32 0.0, %v663
    %665 = vdwg.mxu0
    %v666 = vmul.f32 %v643, %v263
    %v667 = vmul.f32 %v646, %v264
    %v668 = vmul.f32 %v649, %v265
    %v669 = vmul.f32 %v652, %v266
    %v670 = vmul.f32 %v655, %v267
    %v671 = vmul.f32 %v658, %v268
    %v672 = vmul.f32 %v661, %v269
    %v673 = vmul.f32 %v664, %v270
    %v675 = vsel %vm56, %v666, 0
    %v678 = vsel %vm56, %v667, 0
    %v681 = vsel %vm56, %v668, 0
    %v684 = vsel %vm56, %v669, 0
    %v687 = vsel %vm56, %v670, 0
    %v690 = vsel %vm56, %v671, 0
    %v693 = vsel %vm56, %v672, 0
    %v696 = vsel %vm56, %v673, 0
    %698 = vmatpush.msra.mxu0 0.0
    %699 = vmatpush.msra.mxu0 0.0
    %700 = vmatpush.msra.mxu0 0.0
    %701 = vmatpush.msra.mxu0 0.0
    %702 = vmatpush.msra.mxu0 0.0
    %703 = vmatpush.msra.mxu0 0.0
    %704 = vmatpush.msra.mxu0 0.0
    %705 = vmatpush.msra.mxu0 0.0
    %706 = vmatpush.msra.mxu0 %v278
    %707 = vmatpush.msra.mxu0 %v277
    %708 = vmatpush.msra.mxu0 %v276
    %709 = vmatpush.msra.mxu0 %v275
    %710 = vmatpush.msra.mxu0 %v274
    %711 = vmatpush.msra.mxu0 %v273
    %712 = vmatpush.msra.mxu0 %v272
    %713 = vmatpush.msra.mxu0 %v271
    %714 = vmatmul.f32.gmra.mxu0 %v675
    %v715 = vpop.f32.mrf.mxu0
    %v716 = vadd.f32 0.0, %v715
    %717 = vmatmul.f32.gmra.mxu0 %v678
    %v718 = vpop.f32.mrf.mxu0
    %v719 = vadd.f32 0.0, %v718
    %720 = vmatmul.f32.gmra.mxu0 %v681
    %v721 = vpop.f32.mrf.mxu0
    %v722 = vadd.f32 0.0, %v721
    %723 = vmatmul.f32.gmra.mxu0 %v684
    %v724 = vpop.f32.mrf.mxu0
    %v725 = vadd.f32 0.0, %v724
    %726 = vmatmul.f32.gmra.mxu0 %v687
    %v727 = vpop.f32.mrf.mxu0
    %v728 = vadd.f32 0.0, %v727
    %729 = vmatmul.f32.gmra.mxu0 %v690
    %v730 = vpop.f32.mrf.mxu0
    %v731 = vadd.f32 0.0, %v730
    %732 = vmatmul.f32.gmra.mxu0 %v693
    %v733 = vpop.f32.mrf.mxu0
    %v734 = vadd.f32 0.0, %v733
    %735 = vmatmul.f32.gmra.mxu0 %v696
    %v736 = vpop.f32.mrf.mxu0
    %v737 = vadd.f32 0.0, %v736
    %738 = vdwg.mxu0
    %v739 = vld [vmem:[#allocation8 + $0x1d0] sm:$0xff]
    %v740 = vld [vmem:[#allocation8 + $0x1d8] sm:$0xff]
    %v741 = vld [vmem:[#allocation4] sm:$0xff]
    %v742 = vld [vmem:[#allocation4 + $0x8] sm:$0xff]
    %v743 = vld [vmem:[#allocation4 + $0x10] sm:$0xff]
    %v744 = vld [vmem:[#allocation4 + $0x18] sm:$0xff]
    %v745 = vld [vmem:[#allocation4 + $0x20] sm:$0xff]
    %v746 = vld [vmem:[#allocation4 + $0x28] sm:$0xff]
    %v747 = vld [vmem:[#allocation4 + $0x30] sm:$0xff]
    %v748 = vld [vmem:[#allocation4 + $0x38] sm:$0xff]
    %v749 = vmul.f32 %v716, %v741
    %v750 = vmul.f32 %v719, %v742
    %v751 = vmul.f32 %v722, %v743
    %v752 = vmul.f32 %v725, %v744
    %v753 = vmul.f32 %v728, %v745
    %v754 = vmul.f32 %v731, %v746
    %v755 = vmul.f32 %v734, %v747
    %v756 = vmul.f32 %v737, %v748
    %v757 = vld [vmem:[#allocation8 + $0x2a0] sm:$0x1]
    %v758 = vperm.slane %v757, 0
    %v759 = vmul.f32 %v124, %v758
    %v760 = vmul.f32 %v125, %v758
    %v762 = vsel %vm56, %v739, 0
    %v765 = vsel %vm56, %v740, 0
    %767 = vmatpush.msra.mxu0 0.0
    %768 = vmatpush.msra.mxu0 0.0
    %769 = vmatpush.msra.mxu0 0.0
    %770 = vmatpush.msra.mxu0 0.0
    %771 = vmatpush.msra.mxu0 0.0
    %772 = vmatpush.msra.mxu0 0.0
    %773 = vmatpush.msra.mxu0 0.0
    %774 = vmatpush.msra.mxu0 0.0
    %775 = vmatpush.msra.mxu0 %v756
    %776 = vmatpush.msra.mxu0 %v755
    %777 = vmatpush.msra.mxu0 %v754
    %778 = vmatpush.msra.mxu0 %v753
    %779 = vmatpush.msra.mxu0 %v752
    %780 = vmatpush.msra.mxu0 %v751
    %781 = vmatpush.msra.mxu0 %v750
    %782 = vmatpush.msra.mxu0 %v749
    %783 = vmatmul.f32.gmra.mxu0 %v762
    %v784 = vpop.f32.mrf.mxu0
    %v785 = vadd.f32 %v759, %v784
    %786 = vmatmul.f32.gmra.mxu0 %v765
    %v787 = vpop.f32.mrf.mxu0
    %v788 = vadd.f32 %v760, %v787
    %789 = vdwg.mxu0
    %v790 = vsub.f32 0.0, %v152
    %v791 = vsub.f32 0.0, %v155
    %v792 = vmul.f32 %v790, 1.442695
    %v793 = vpow.pop %v792
    %v794 = vmul.f32 %v791, 1.442695
    %v795 = vpow.pop %v794
    %v796 = vadd.f32 %v793, 1.0
    %v797 = vadd.f32 %v795, 1.0
    %v798 = vrcp.pop %v796
    %v799 = vmul.f32 %v796, %v798
    %v800 = vsub.f32 1.0, %v799
    %v801 = vmul.f32 %v798, %v800
    %v802 = vadd.f32 %v798, %v801
    %vm803 = vweird.f32 %v796
    %vm804 = vweird.f32 %v798
    %vm805 = vmor %vm803, %vm804
    %v806 = vsel %vm805, %v798, %v802
    %v807 = vand.u32 2147483647, %v796
    %vm808 = vcmp.eq.f32.partialorder %v807, 8.507059e+37
    %v809 = vand.u32 %v796, 2147483648
    %v810 = vor.u32 1.1754944e-38, %v809
    %v811 = vsel %vm808, %v810, %v806
    %v812 = vmul.f32 1.0, %v811
    %v813 = vrcp.pop %v797
    %v814 = vmul.f32 %v797, %v813
    %v815 = vsub.f32 1.0, %v814
    %v816 = vmul.f32 %v813, %v815
    %v817 = vadd.f32 %v813, %v816
    %vm818 = vweird.f32 %v797
    %vm819 = vweird.f32 %v813
    %vm820 = vmor %vm818, %vm819
    %v821 = vsel %vm820, %v813, %v817
    %v822 = vand.u32 2147483647, %v797
    %vm823 = vcmp.eq.f32.partialorder %v822, 8.507059e+37
    %v824 = vand.u32 %v797, 2147483648
    %v825 = vor.u32 1.1754944e-38, %v824
    %v826 = vsel %vm823, %v825, %v821
    %v827 = vmul.f32 1.0, %v826
    %v828 = vmul.f32 %v152, %v812
    %v829 = vmul.f32 %v155, %v827
    %v830 = vmul.f32 %v785, %v828
    %v831 = vmul.f32 %v788, %v829
    %v832 = vld [vmem:[#allocation8 + $0x2a8] sm:$0xff]
    %v833 = vld [vmem:[#allocation8 + $0x2b0] sm:$0xff]
    %v834 = vld [vmem:[#allocation8 + $0x2b8] sm:$0xff]
    %v835 = vld [vmem:[#allocation8 + $0x2c0] sm:$0xff]
    %v836 = vld [vmem:[#allocation8 + $0x2c8] sm:$0xff]
    %v837 = vld [vmem:[#allocation8 + $0x2d0] sm:$0xff]
    %v838 = vld [vmem:[#allocation8 + $0x2d8] sm:$0xff]
    %v839 = vld [vmem:[#allocation8 + $0x2e0] sm:$0xff]
    %v840 = vld [vmem:[#allocation8 + $0x2e8] sm:$0xff]
    %v841 = vld [vmem:[#allocation8 + $0x2f0] sm:$0xff]
    %v842 = vld [vmem:[#allocation8 + $0x2f8] sm:$0xff]
    %v843 = vld [vmem:[#allocation8 + $0x300] sm:$0xff]
    %v844 = vld [vmem:[#allocation8 + $0x308] sm:$0xff]
    %v845 = vld [vmem:[#allocation8 + $0x310] sm:$0xff]
    %v846 = vld [vmem:[#allocation8 + $0x318] sm:$0xff]
    %v847 = vld [vmem:[#allocation8 + $0x320] sm:$0xff]
    %v848 = vld [vmem:[#allocation8 + $0x328] sm:$0x1]
    %v849 = vperm.slane %v848, 0
    %850 = vmatpush.msra.mxu0 %v847
    %851 = vmatpush.msra.mxu0 %v846
    %852 = vmatpush.msra.mxu0 %v845
    %853 = vmatpush.msra.mxu0 %v844
    %854 = vmatpush.msra.mxu0 %v843
    %855 = vmatpush.msra.mxu0 %v842
    %856 = vmatpush.msra.mxu0 %v841
    %857 = vmatpush.msra.mxu0 %v840
    %858 = vmatpush.msra.mxu0 %v839
    %859 = vmatpush.msra.mxu0 %v838
    %860 = vmatpush.msra.mxu0 %v837
    %861 = vmatpush.msra.mxu0 %v836
    %862 = vmatpush.msra.mxu0 %v835
    %863 = vmatpush.msra.mxu0 %v834
    %864 = vmatpush.msra.mxu0 %v833
    %865 = vmatpush.msra.mxu0 %v832
    %866 = vmatmul.f32.gmra.mxu0 %v830
    %v867 = vpop.f32.mrf.mxu0
    %v868 = vadd.f32 %v849, %v867
    %869 = vmatmul.f32.gmra.mxu0 %v831
    %v870 = vpop.f32.mrf.mxu0
    %v871 = vadd.f32 %v849, %v870
    %872 = vdwg.mxu0
    %873 = vst [vmem:[#allocation10] sm:$0xff] %v868
    %874 = vst [vmem:[#allocation10 + $0x8] sm:$0xff] %v871
    // Predicated region
    $region18: #{tpu_custom_call.1} parent=1 // pred_check
      _
    $region19: #{tpu_custom_call.1} parent=1 // pred_check_branch
      %876 = sbr.rel (0) target = $region21
    $region20: #{tpu_custom_call.1} parent=1 // pred_region
      %878 = vsyncadd [#allocation7], 0
      %s879 = sshll.u32 [#allocation10], 4
      %s880 = int_to_ptr.vmem [resolvable:$true] %s879
      %s881 = sshll.u32 %s2, 4
      %s882 = int_to_ptr.hbm [resolvable:$true] %s881
      %887 = dma.vmem_to_hbm [thread:$0]  %s880, 256, %s882, [#allocation7], 128, 128, 8
    $region21: #{tpu_custom_call.1} parent=1 // pred_fallthru
      _
    // Predicated region
    $region22: #{tpu_custom_call.1} parent=1 // pred_check
      _
    $region23: #{tpu_custom_call.1} parent=1 // pred_check_branch
      %889 = sbr.rel (0) target = $region25
    $region24: #{tpu_custom_call.1} parent=1 // pred_region
      %891 = dma.done [#allocation7], 256
    $region25: #{tpu_custom_call.1} parent=1 // pred_fallthru
      _
    %892 = vsyncpa [#allocation6], 1
    %893 = vsyncpa [#allocation9], 1
    %894 = vsyncpa [#allocation7], 1

</llo_original>
